<compile_context>
chip_gen: v7x
topology: tpu7x:2x2x1
jax: 0.10.0
libtpu: 0.0.40
codegen_flags: <defaults>
</compile_context>

<pallas_src>
import functools

import jax
import jax.numpy as jnp
import numpy as np
from jax.experimental import pallas as pl
from jax.experimental.pallas import tpu as pltpu


def _space_to_depth_kernel(x_ref, o_ref, *, blk, cblk):
    """Pure data movement.

    x_ref: (th, blk, wt, blk*C)   -- hb is dim 1 (plain static index)
    o_ref: (th, wt, blk*blk*C)    -- channel order (hb*blk + wb)*C + c

    Each hb plane of the input block is a contiguous (th, wt, blk*C) slab that
    lands at static lane offset hb*blk*C of the output channel dim.  When
    blk*C is a multiple of 128 these stores are unmasked whole-vreg vst; for
    small C they are masked but the kernel remains DMA-bound at these sizes.
    """
    for hb in range(blk):  # blk is a small static Python int -> unrolled
        o_ref[:, :, hb * cblk:(hb + 1) * cblk] = x_ref[:, hb, :, :]


def _vmem_budget():
    """(per-block byte budget, vmem_limit_bytes), chosen per TPU generation."""
    vmem_cap = 0
    try:
        info = pltpu.get_tpu_info()
        vmem_cap = int(getattr(info, "vmem_capacity_bytes", 0))
    except Exception:
        vmem_cap = 0
    if vmem_cap >= 96 * 1024 * 1024:        # v5e / v6e class: 128 MiB VMEM
        return 14 * 1024 * 1024, 80 * 1024 * 1024
    # v7x class (64 MiB per TensorCore) and unknown-generation safe fallback.
    return 7 * 1024 * 1024, 48 * 1024 * 1024


def _pick_tiles(n_rows, w_blocks, bytes_per_row, bytes_per_wcol, budget):
    """Row-tile (th) and W-tile (wt) sizes, bounded only by the VMEM budget."""
    if bytes_per_row <= budget:
        wt = w_blocks                                    # full-width rows
        th = max(1, min(n_rows, budget // bytes_per_row))
        # Keep >= 2 grid steps so v7x's two TensorCores both get work.
        if n_rows >= 2:
            th = min(th, -(-n_rows // 2))
    else:
        # One row group does not fit: tile the Wb axis too.  wt is a multiple
        # of 8 (or the full Wb) to respect the (8, 128) block-shape rule.
        th = 1
        wt = max(8, (budget // max(bytes_per_wcol, 1)) // 8 * 8)
        wt = min(wt, w_blocks)
    return th, wt


def space_to_depth_nhwc(x_nhwc, block_size):
    """NHWC -> NHWC-depth space-to-depth: (B,H,W,C) -> (B,H/b,W/b,C*b*b).

    Recommended end-to-end API: one HBM read + one HBM write.
    """
    B, H, W, C = x_nhwc.shape
    b = int(block_size)
    assert H % b == 0 and W % b == 0, "H and W must be multiples of block_size"
    Hb, Wb = H // b, W // b
    cblk = b * C             # lane width of one hb channel slab
    Cd = b * cblk            # C * b * b
    R = B * Hb               # flattened (batch, output-row) axis

    # Free, contiguous reshape: (B, H, W, C) -> (B*Hb, b, Wb, b*C).
    x4 = x_nhwc.reshape(R, b, Wb, cblk)

    itemsize = np.dtype(x_nhwc.dtype).itemsize
    bytes_per_row = b * W * C * itemsize     # one flattened row group
    bytes_per_wcol = b * cblk * itemsize     # one Wb column of a row group
    budget, vmem_limit = _vmem_budget()
    th, wt = _pick_tiles(R, Wb, bytes_per_row, bytes_per_wcol, budget)

    grid = (pl.cdiv(R, th), pl.cdiv(Wb, wt))

    out = pl.pallas_call(
        functools.partial(_space_to_depth_kernel, blk=b, cblk=cblk),
        out_shape=jax.ShapeDtypeStruct((R, Wb, Cd), x_nhwc.dtype),
        grid=grid,
        in_specs=[
            # Minor two block dims are either full array dims or multiples of
            # 8/full -> (8, 128) BlockSpec rule satisfied for every shape.
            pl.BlockSpec((th, b, wt, cblk), lambda r, w: (r, 0, w, 0)),
        ],
        out_specs=pl.BlockSpec((th, wt, Cd), lambda r, w: (r, w, 0)),
        compiler_params=pltpu.CompilerParams(
            dimension_semantics=("parallel", "parallel"),
            vmem_limit_bytes=vmem_limit,
        ),
        # Pure memory traffic: one read + one write of the tensor.
        cost_estimate=pl.CostEstimate(
            flops=0,
            transcendentals=0,
            bytes_accessed=2 * B * H * W * C * itemsize,
        ),
    )(x4)
    return out.reshape(B, Hb, Wb, Cd)


def space_to_depth(x_nchw, block_size):
    """Drop-in equivalent of the PyTorch SpaceToDepth module (NCHW in/out)."""
    # Layout glue only; the kernel itself is NHWC-native.  Prefer calling
    # space_to_depth_nhwc() directly when activations are already NHWC.
    x_nhwc = jnp.transpose(x_nchw, (0, 2, 3, 1))
    out_nhwc = space_to_depth_nhwc(x_nhwc, block_size)
    return jnp.transpose(out_nhwc, (0, 3, 1, 2))


def space_to_depth_reference(x_nchw, block_size):
    """Pure-JAX reference mirroring the PyTorch forward exactly."""
    B, C, H, W = x_nchw.shape
    b = block_size
    y = x_nchw.reshape(B, C, H // b, b, W // b, b)
    y = jnp.transpose(y, (0, 3, 5, 1, 2, 4))        # (B, hb, wb, C, Hb, Wb)
    return y.reshape(B, C * b * b, H // b, W // b)


if __name__ == "__main__":
    key = jax.random.PRNGKey(0)
    B, C, H, W = 2, 4, 16, 16
    block_size = 2

    x = jax.random.normal(key, (B, C, H, W), dtype=jnp.float32)

    fn = jax.jit(functools.partial(space_to_depth, block_size=block_size))
    out = jax.block_until_ready(fn(x))

    ref = space_to_depth_reference(x, block_size)
    assert out.shape == (B, C * block_size * block_size,
                         H // block_size, W // block_size)
    np.testing.assert_array_equal(np.asarray(out), np.asarray(ref))

    # Also exercise the recommended NHWC end-to-end path.
    x_nhwc = jnp.transpose(x, (0, 2, 3, 1))
    nhwc_fn = jax.jit(functools.partial(space_to_depth_nhwc,
                                        block_size=block_size))
    out_nhwc = jax.block_until_ready(nhwc_fn(x_nhwc))
    np.testing.assert_array_equal(
        np.asarray(jnp.transpose(out_nhwc, (0, 3, 1, 2))), np.asarray(ref))

    print("KERNEL_OK")
</pallas_src>

<mosaic_0001>
module attributes {stable_mosaic.version = 11 : i64} {
  func.func @_space_to_depth_kernel(%arg0: i32, %arg1: i32, %arg2: memref<8x2x8x8xf32, #tpu.memory_space<vmem>>, %arg3: memref<8x8x16xf32, #tpu.memory_space<vmem>>) attributes {dimension_semantics = [#tpu.dimension_semantics<parallel>, #tpu.dimension_semantics<parallel>], iteration_bounds = array<i64: 2, 1>, scalar_prefetch = 0 : i64, scratch_operands = 0 : i64, tpu.core_type = #tpu.core_type<tc>, window_params = [{transform_indices = @transform_0, window_bounds = array<i64: 8, 2, 8, 8>}, {transform_indices = @transform_1, window_bounds = array<i64: 8, 8, 16>}]} {
    %c0 = arith.constant 0 : index
    %c0_0 = arith.constant 0 : index
    %c0_1 = arith.constant 0 : index
    %c0_2 = arith.constant 0 : index
    %0 = vector.load %arg2[%c0, %c0_0, %c0_1, %c0_2] : memref<8x2x8x8xf32, #tpu.memory_space<vmem>>, vector<8x1x8x8xf32>
    %1 = vector.shape_cast %0 : vector<8x1x8x8xf32> to vector<8x8x8xf32>
    %c0_3 = arith.constant 0 : index
    %c0_4 = arith.constant 0 : index
    %c0_5 = arith.constant 0 : index
    %2 = vector.load %arg3[%c0_3, %c0_4, %c0_5] : memref<8x8x16xf32, #tpu.memory_space<vmem>>, vector<8x8x8xf32>
    tpu.vector_store %arg3[%c0_3, %c0_4, %c0_5], %1 {strides = array<i32>} : memref<8x8x16xf32, #tpu.memory_space<vmem>>, vector<8x8x8xf32>,
    %c0_6 = arith.constant 0 : index
    %c1 = arith.constant 1 : index
    %c0_7 = arith.constant 0 : index
    %c0_8 = arith.constant 0 : index
    %3 = vector.load %arg2[%c0_6, %c1, %c0_7, %c0_8] : memref<8x2x8x8xf32, #tpu.memory_space<vmem>>, vector<8x1x8x8xf32>
    %4 = vector.shape_cast %3 : vector<8x1x8x8xf32> to vector<8x8x8xf32>
    %c0_9 = arith.constant 0 : index
    %c0_10 = arith.constant 0 : index
    %c8 = arith.constant 8 : index
    %5 = vector.load %arg3[%c0_9, %c0_10, %c8] : memref<8x8x16xf32, #tpu.memory_space<vmem>>, vector<8x8x8xf32>
    tpu.vector_store %arg3[%c0_9, %c0_10, %c8], %4 {strides = array<i32>} : memref<8x8x16xf32, #tpu.memory_space<vmem>>, vector<8x8x8xf32>,
    return
  }
  func.func @transform_0(%arg0: i32, %arg1: i32) -> (i32, i32, i32, i32) {
    %c0_i32 = arith.constant 0 : i32
    %c0_i32_0 = arith.constant 0 : i32
    %c0_i32_1 = arith.constant 0 : i32
    return %arg0, %c0_i32, %arg1, %c0_i32_0 : i32, i32, i32, i32
  }
  func.func @transform_1(%arg0: i32, %arg1: i32) -> (i32, i32, i32) {
    %c0_i32 = arith.constant 0 : i32
    %c0_i32_0 = arith.constant 0 : i32
    return %arg0, %arg1, %c0_i32 : i32, i32, i32
  }
}

</mosaic_0001>

<llo_original>
// kernel: space_to_depth.1
$region0: #{space_to_depth.1}
  #allocation0 [shape = 'u32[]', space=smem, size = 0x4, offset = 0x4, fixed_abs, tag = 'smem constant byte address 0x4 - core index']
  #allocation1 [shape = 'u32[144,128]{1,0:T(1,128)}', space=vmem, size = 0x12000, scoped, tag = 'internal scratch']
  %s0 = inlined_call_operand.vmem [shape: f32[16,2,8,8], index: 0, kind: input, shape index: {}]
  %s1 = inlined_call_operand.hbm [shape: f32[16,8,16], index: 1, kind: output, shape index: {}]
  %s2 = sld [smem:[#allocation0]]
  $region37: #{space_to_depth.1} parent=0
    _
  %s4 = ssub.s32 1, %s2
  %s5 = scalar_select 0, %s4, %s2
  $region1: #{space_to_depth.1} parent=0
    #allocation2 [shape = 'u8[65536]{0}', space=vmem, size = 0x10000, scoped, tag = 'output window, operand 0']
    #allocation3 [shape = 's32[2]{0}', space=sflag, size = 0x8, scoped, tag = 'scoped memory for space_to_depth.1']
    %6 = vsyncpa [#allocation3], 0
    %s7 = scalar_lea.sflag [#allocation3], 1
    %8 = vsyncpa %s7, 0
    loop: start=0, step=1, limit=4
    $region2: #{space_to_depth.1} parent=1 // loop_pre_header
      _
    $region3: #{space_to_depth.1} parent=1 // loop_header
      %s10 = sphi 0, %s14
      %p11 = scmp.ge.s32.totalorder %s10, 4
      %s17 = sphi 0, %s29
      %s18 = sphi 0, %s25
      %s19 = sphi 0, %s17
      %s20 = sphi 0, %s18
      %s21 = sphi 0, %s19
      %s22 = sphi 0, %s20
      %s34 = sphi 0, %s36
      %s37 = sphi 0, %s34
      %s38 = sphi 0, %s37
      %s54 = sphi 0, %s38
      %s62 = sphi 0, %s64
      %s65 = sphi 0, %s62
      %s66 = sphi 0, %s65
      %s82 = sphi 0, %s66
    $region4: #{space_to_depth.1} parent=1 // loop_header_branch
      %13 = sbr.rel (%p11) target = $region8
    $region5: #{space_to_depth.1} parent=1 // loop_body
      %s15 = ssub.s32 %s10, 1
      %s16 = ssub.s32 %s10, 2
      %s23 = sadd.s32 1, %s18
      %p24 = scmp.ge.s32.totalorder %s23, 1
      %s25 = scalar_select %p24, 0, %s23
      %s26 = sadd.s32 1, %s17
      %s27 = scalar_select %p24, %s26, %s17
      %p28 = scmp.ge.s32.totalorder %s27, 2
      %s29 = scalar_select %p28, 0, %s27
      %s30 = ssub.s32 %s17, %s29
      %s31 = ssub.s32 %s18, %s25
      %s32 = sor.u32 %s30, %s31
      %p33 = scmp.eq.s32.totalorder %s32, 0
      %s35 = sadd.s32 %s34, 1
      %s36 = scalar_select %p33, %s34, %s35
      %p39 = pneg %p33
      %p40 = scmp.eq.s32.totalorder %s10, 1
      %p41 = por %p39, %p40
      %p42 = scmp.ne.s32.totalorder %s34, %s37
      %p43 = scmp.eq.s32.totalorder %s10, 0
      %p44 = por %p42, %p43
      %p45 = scmp.ne.s32.totalorder %s34, %s37
      %p46 = scmp.eq.s32.totalorder %s15, 1
      %p47 = por %p45, %p46
      %p48 = scmp.ne.s32.totalorder %s37, %s38
      %p49 = scmp.eq.s32.totalorder %s15, 0
      %p50 = por %p48, %p49
      %p51 = scmp.ne.s32.totalorder %s37, %s38
      %p52 = scmp.eq.s32.totalorder %s16, 1
      %p53 = por %p51, %p52
      %p55 = scmp.ne.s32.totalorder %s38, %s54
      %p56 = scmp.eq.s32.totalorder %s16, 0
      %p57 = por %p55, %p56
      %s58 = ssub.s32 %s17, %s29
      %s59 = ssub.s32 %s18, %s25
      %s60 = sor.u32 %s58, %s59
      %p61 = scmp.eq.s32.totalorder %s60, 0
      %s63 = sadd.s32 %s62, 1
      %s64 = scalar_select %p61, %s62, %s63
      %p67 = pneg %p61
      %p68 = scmp.eq.s32.totalorder %s10, 1
      %p69 = por %p67, %p68
      %p70 = scmp.ne.s32.totalorder %s62, %s65
      %p71 = scmp.eq.s32.totalorder %s10, 0
      %p72 = por %p70, %p71
      %p73 = scmp.ne.s32.totalorder %s62, %s65
      %p74 = scmp.eq.s32.totalorder %s15, 1
      %p75 = por %p73, %p74
      %p76 = scmp.ne.s32.totalorder %s65, %s66
      %p77 = scmp.eq.s32.totalorder %s15, 0
      %p78 = por %p76, %p77
      %p79 = scmp.ne.s32.totalorder %s65, %s66
      %p80 = scmp.eq.s32.totalorder %s16, 1
      %p81 = por %p79, %p80
      %p83 = scmp.ne.s32.totalorder %s66, %s82
      %p84 = scmp.eq.s32.totalorder %s16, 0
      %p85 = por %p83, %p84
      %p86 = scmp.le.s32.totalorder 1, %s10
      %p87 = scmp.lt.s32.totalorder %s10, 3
      %p88 = pnand %p86, %p87
      %p89 = pneg %p88
      // Predicated region
      $region9: #{space_to_depth.1} parent=5 // pred_check
        _
      $region10: #{space_to_depth.1} parent=5 // pred_check_branch
        %91 = sbr.rel (%p88) target = $region12
      $region11: #{space_to_depth.1} parent=5 // pred_region
        %s92 = ssub.s32 %s10, 1
      $region12: #{space_to_depth.1} parent=5 // pred_fallthru
        _
      %p93 = scmp.lt.s32.totalorder %s10, 2
      // Predicated region
      $region13: #{space_to_depth.1} parent=5 // pred_check
        %p94 = pneg %p93
      $region14: #{space_to_depth.1} parent=5 // pred_check_branch
        %96 = sbr.rel (%p94) target = $region16
      $region15: #{space_to_depth.1} parent=5 // pred_region
        // Predicated region
        $region17: #{space_to_depth.1} parent=15 // pred_check
          %p97 = pneg %p44
        $region18: #{space_to_depth.1} parent=15 // pred_check_branch
          %99 = sbr.rel (%p97) target = $region20
        $region19: #{space_to_depth.1} parent=15 // pred_region
          %s100 = smul.u32 8, %s17
          %p101 = scmp.lt.s32.totalorder %s100, 15
          %s102 = scalar_select %p101, %s100, 15
          %p103 = scmp.lt.s32.totalorder %s18, 0
          %s104 = scalar_select %p103, %s18, 0
          %s105 = smul.addr %s102, 2
          %s106 = sadd.s32 %s104, %s105
          %s107 = smul.addr %s106, 8
          %s108 = scalar_lea.vmem %s0, %s107
          %s109 = smul.u32 8, %s17
        $region20: #{space_to_depth.1} parent=15 // pred_fallthru
          _
      $region16: #{space_to_depth.1} parent=5 // pred_fallthru
        _
      %p110 = scmp.le.s32.totalorder 1, %s10
      %p111 = scmp.lt.s32.totalorder %s10, 3
      %p112 = pnand %p110, %p111
      %p113 = pneg %p112
      // Predicated region
      $region21: #{space_to_depth.1} parent=5 // pred_check
        _
      $region22: #{space_to_depth.1} parent=5 // pred_check_branch
        %115 = sbr.rel (%p112) target = $region24
      $region23: #{space_to_depth.1} parent=5 // pred_region
        %s116 = ssub.s32 %s10, 1
        %s117 = smul.u32 8, %s19
        %p118 = scmp.lt.s32.totalorder %s117, 15
        %s119 = scalar_select %p118, %s117, 15
        %p120 = scmp.lt.s32.totalorder %s20, 0
        %s121 = scalar_select %p120, %s20, 0
        %s122 = smul.addr %s119, 2
        %s123 = sadd.s32 %s121, %s122
        %s124 = smul.addr %s123, 8
        %s125 = scalar_lea.vmem %s0, %s124
        %p126 = pneg %p50
        %p127 = pneg %p47
        %p128 = pneg %p78
        %p129 = pneg %p75
        %s130 = sand.u32 %s65, 1
        %s131 = scalar_lea.sflag [#allocation3], %s130
        %s132 = sand.u32 %s65, 1
        %s133 = smul.addr %s132, 64
        %s134 = scalar_lea.vmem [#allocation2], %s133
        %s135 = smul.u32 8, %s19
        %p136 = scmp.lt.s32.totalorder %s135, 15
        %s137 = scalar_select %p136, %s135, 15
        %p138 = scmp.lt.s32.totalorder %s20, 0
        %s139 = scalar_select %p138, %s20, 0
        %s140 = smul.addr %s137, 2
        %s141 = sadd.s32 %s139, %s140
        %s142 = smul.addr %s141, 8
        %s143 = scalar_lea.vmem %s0, %s142
        %s144 = smul.u32 8, %s19
        %s145 = smul.u32 8, %s19
        %v146 = vld [vmem:[%s143] sm:$0xff]
        %v147 = vld [vmem:[%s143 + $0x10] sm:$0xff]
        %v148 = vld [vmem:[%s143 + $0x20] sm:$0xff]
        %v149 = vld [vmem:[%s143 + $0x30] sm:$0xff]
        %v150 = vld [vmem:[%s143 + $0x40] sm:$0xff]
        %v151 = vld [vmem:[%s143 + $0x50] sm:$0xff]
        %v152 = vld [vmem:[%s143 + $0x60] sm:$0xff]
        %v153 = vld [vmem:[%s143 + $0x70] sm:$0xff]
        %vm154 = vcmask 64512
        %155 = vst.msk [vmem:[%s134] sm:$0xff] %vm154, %v146
        %156 = vst.msk [vmem:[%s134 + $0x8] sm:$0xff] %vm154, %v147
        %157 = vst.msk [vmem:[%s134 + $0x10] sm:$0xff] %vm154, %v148
        %158 = vst.msk [vmem:[%s134 + $0x18] sm:$0xff] %vm154, %v149
        %159 = vst.msk [vmem:[%s134 + $0x20] sm:$0xff] %vm154, %v150
        %160 = vst.msk [vmem:[%s134 + $0x28] sm:$0xff] %vm154, %v151
        %161 = vst.msk [vmem:[%s134 + $0x30] sm:$0xff] %vm154, %v152
        %162 = vst.msk [vmem:[%s134 + $0x38] sm:$0xff] %vm154, %v153
        %s163 = scalar_lea.vmem %s143, 8
        %v164 = vld [vmem:[%s163] sm:$0xff]
        %v165 = vld [vmem:[%s163 + $0x10] sm:$0xff]
        %v166 = vld [vmem:[%s163 + $0x20] sm:$0xff]
        %v167 = vld [vmem:[%s163 + $0x30] sm:$0xff]
        %v168 = vld [vmem:[%s163 + $0x40] sm:$0xff]
        %v169 = vld [vmem:[%s163 + $0x50] sm:$0xff]
        %v170 = vld [vmem:[%s163 + $0x60] sm:$0xff]
        %v171 = vld [vmem:[%s163 + $0x70] sm:$0xff]
        %180 = vrot.lane.b32.xlu0 %v164, 8
        %v181 = vpop.permute.xlu0 %180
        %182 = vrot.lane.b32.xlu0 %v165, 8
        %v183 = vpop.permute.xlu0 %182
        %184 = vrot.lane.b32.xlu0 %v166, 8
        %v185 = vpop.permute.xlu0 %184
        %186 = vrot.lane.b32.xlu0 %v167, 8
        %v187 = vpop.permute.xlu0 %186
        %188 = vrot.lane.b32.xlu0 %v168, 8
        %v189 = vpop.permute.xlu0 %188
        %190 = vrot.lane.b32.xlu0 %v169, 8
        %v191 = vpop.permute.xlu0 %190
        %192 = vrot.lane.b32.xlu0 %v170, 8
        %v193 = vpop.permute.xlu0 %192
        %194 = vrot.lane.b32.xlu0 %v171, 8
        %v195 = vpop.permute.xlu0 %194
        %vm204 = vcmask 130112
        %205 = vst.msk [vmem:[%s134] sm:$0xff] %vm204, %v181
        %206 = vst.msk [vmem:[%s134 + $0x8] sm:$0xff] %vm204, %v183
        %207 = vst.msk [vmem:[%s134 + $0x10] sm:$0xff] %vm204, %v185
        %208 = vst.msk [vmem:[%s134 + $0x18] sm:$0xff] %vm204, %v187
        %209 = vst.msk [vmem:[%s134 + $0x20] sm:$0xff] %vm204, %v189
        %210 = vst.msk [vmem:[%s134 + $0x28] sm:$0xff] %vm204, %v191
        %211 = vst.msk [vmem:[%s134 + $0x30] sm:$0xff] %vm204, %v193
        %212 = vst.msk [vmem:[%s134 + $0x38] sm:$0xff] %vm204, %v195
        %s213 = sand.u32 %s65, 1
        %s214 = scalar_lea.sflag [#allocation3], %s213
        %s215 = sand.u32 %s65, 1
        %s216 = smul.addr %s215, 64
        %s217 = scalar_lea.vmem [#allocation2], %s216
        // Predicated region
        $region25: #{space_to_depth.1} parent=23 // pred_check
          %p218 = pneg %p75
        $region26: #{space_to_depth.1} parent=23 // pred_check_branch
          %220 = sbr.rel (%p218) target = $region28
        $region27: #{space_to_depth.1} parent=23 // pred_region
          %s221 = smul.u32 8, %s19
          %s223 = ssub.s32 1024, 1024
          %224 = vsyncadd %s214, %s223
          %s225 = sadd.s32 %s20, %s221
          %s226 = smul.addr %s225, 128
          %s227 = scalar_lea.hbm %s1, %s226
          %s228 = sshll.u32 %s217, 4
          %s229 = int_to_ptr.vmem [resolvable:$true] %s228
          %234 = dma.vmem_to_hbm [thread:$0]  %s229, 1024, %s227, %s214, 128, 128, 8
        $region28: #{space_to_depth.1} parent=23 // pred_fallthru
          _
      $region24: #{space_to_depth.1} parent=5 // pred_fallthru
        _
      %p235 = scmp.le.s32.totalorder 2, %s10
      // Predicated region
      $region29: #{space_to_depth.1} parent=5 // pred_check
        %p236 = pneg %p235
      $region30: #{space_to_depth.1} parent=5 // pred_check_branch
        %238 = sbr.rel (%p236) target = $region32
      $region31: #{space_to_depth.1} parent=5 // pred_region
        %s239 = ssub.s32 %s10, 2
        // Predicated region
        $region33: #{space_to_depth.1} parent=31 // pred_check
          %p240 = pneg %p81
        $region34: #{space_to_depth.1} parent=31 // pred_check_branch
          %242 = sbr.rel (%p240) target = $region36
        $region35: #{space_to_depth.1} parent=31 // pred_region
          %s243 = sand.u32 %s66, 1
          %s244 = scalar_lea.sflag [#allocation3], %s243
          %s245 = sand.u32 %s66, 1
          %s246 = smul.addr %s245, 64
          %s247 = scalar_lea.vmem [#allocation2], %s246
          %248 = dma.done %s244, 1024
        $region36: #{space_to_depth.1} parent=31 // pred_fallthru
          _
      $region32: #{space_to_depth.1} parent=5 // pred_fallthru
        _
    $region6: #{space_to_depth.1} parent=1 // loop_footer
      %s14 = sadd.s32 1, %s10
    $region7: #{space_to_depth.1} parent=1 // loop_footer_branch
      %9 = sbr.rel target = $region3
    $region8: #{space_to_depth.1} parent=1 // loop_exit
      _
    %249 = vsyncpa [#allocation3], 1
    %s250 = scalar_lea.sflag [#allocation3], 1
    %251 = vsyncpa %s250, 1

</llo_original>
